<compile_context>
chip_gen: v7x
topology: tpu7x:2x2x1
jax: 0.10.0
libtpu: 0.0.40
codegen_flags: <defaults>
</compile_context>

<pallas_src>
import functools

import jax
import jax.numpy as jnp
from jax.experimental import pallas as pl
from jax.experimental.pallas import tpu as pltpu


def _round_up(x, m):
    return ((x + m - 1) // m) * m


def _pick_tile_hw(C, HW, itemsize, budget_bytes=1024 * 1024):
    """Largest multiple-of-128 spatial tile whose (C, THW) block stays within budget."""
    hw128 = _round_up(HW, 128)
    max_thw = max(128, (budget_bytes // max(1, C * itemsize)) // 128 * 128)
    return min(hw128, max_thw)


# ---------------- Pass 1: squeeze (global average pool), tiled over HW ----------------

def _pool_kernel(x_ref, pooled_ref, acc_ref, *, inv_hw):
    # x_ref: (1, C, THW) spatial tile for batch n; pooled_ref: (1, C, 1) f32 output.
    t = pl.program_id(1)

    @pl.when(t == 0)
    def _():
        acc_ref[...] = jnp.zeros_like(acc_ref)

    # Partial sum over this spatial tile; accumulate in f32 (XLU lane-reduce + VPU add).
    acc_ref[...] += jnp.sum(x_ref[0].astype(jnp.float32), axis=-1, keepdims=True)

    @pl.when(t == pl.num_programs(1) - 1)
    def _():
        # mean = sum * (1/HW); reciprocal is a compile-time constant.
        pooled_ref[0] = acc_ref[...] * inv_hw


# ---------------- Pass 2: rescale x by the per-(N, C) gate, tiled over HW -------------

def _scale_kernel(x_ref, s_ref, o_ref):
    # x_ref: (1, C, THW), s_ref: (1, C, 1); lane-broadcast multiply in the native dtype.
    o_ref[...] = x_ref[...] * s_ref[...]


def se_layer(x, w1, b1, w2, b2, *, tile_hw=None, vmem_limit_bytes=32 * 1024 * 1024):
    """SELayer forward. x: (N, C, H, W) NCHW; w1: (Cr, C), b1: (Cr,), w2: (C, Cr), b2: (C,)."""
    N, C, H, W = x.shape
    HW = H * W

    thw = tile_hw or _pick_tile_hw(C, HW, x.dtype.itemsize)
    HW_pad = _round_up(HW, thw)
    n_tiles = HW_pad // thw

    x_flat = x.reshape(N, C, HW)
    if HW_pad != HW:
        # Zero-pad the flattened spatial axis so every tile is full: keeps stores
        # lane-dense (multiple of 128) and leaves the pooled sum unchanged.
        x_flat = jnp.pad(x_flat, ((0, 0), (0, 0), (0, HW_pad - HW)))

    # ---- Pass 1: pooled means (N, C, 1) in f32, streamed over HW tiles ----
    pooled = pl.pallas_call(
        functools.partial(_pool_kernel, inv_hw=1.0 / HW),
        out_shape=jax.ShapeDtypeStruct((N, C, 1), jnp.float32),
        grid_spec=pltpu.PrefetchScalarGridSpec(
            num_scalar_prefetch=0,
            grid=(N, n_tiles),
            in_specs=[pl.BlockSpec((1, C, thw), lambda n, t: (n, 0, t))],
            out_specs=pl.BlockSpec((1, C, 1), lambda n, t: (n, 0, 0)),
            scratch_shapes=[pltpu.VMEM((C, 1), jnp.float32)],
        ),
        compiler_params=pltpu.CompilerParams(
            dimension_semantics=("parallel", "arbitrary"),
            vmem_limit_bytes=vmem_limit_bytes),
    )(x_flat)

    # ---- Excite: two tiny FC layers batched over N (plain XLA; negligible FLOPs).
    # Done once per call instead of a 1-column MXU matvec on every grid step.
    y = pooled[..., 0]                                                             # (N, C) f32
    h = jnp.maximum(y @ w1.T.astype(jnp.float32) + b1.astype(jnp.float32), 0.0)    # (N, Cr)
    s = jax.nn.sigmoid(h @ w2.T.astype(jnp.float32) + b2.astype(jnp.float32))      # (N, C)
    # Gate computed in f32, cast down once so the bandwidth-bound scale pass runs in
    # the input dtype (bf16 stays bf16 on v6e/v7x; Mosaic widens internally on v5e).
    s = s.astype(x.dtype).reshape(N, C, 1)

    # ---- Pass 2: rescale the full activation with a deep, lane-dense grid ----
    out_flat = pl.pallas_call(
        _scale_kernel,
        out_shape=jax.ShapeDtypeStruct((N, C, HW_pad), x.dtype),
        grid_spec=pltpu.PrefetchScalarGridSpec(
            num_scalar_prefetch=0,
            grid=(N, n_tiles),
            in_specs=[
                pl.BlockSpec((1, C, thw), lambda n, t: (n, 0, t)),   # x tile (streamed)
                pl.BlockSpec((1, C, 1), lambda n, t: (n, 0, 0)),     # gate (resident per n)
            ],
            out_specs=pl.BlockSpec((1, C, thw), lambda n, t: (n, 0, t)),
        ),
        compiler_params=pltpu.CompilerParams(
            dimension_semantics=("parallel", "parallel"),
            vmem_limit_bytes=vmem_limit_bytes),
    )(x_flat, s)

    if HW_pad != HW:
        out_flat = out_flat[:, :, :HW]
    return out_flat.reshape(N, C, H, W)


def se_layer_ref(x, w1, b1, w2, b2):
    # Pure-JAX reference mirroring the PyTorch forward.
    y = jnp.mean(x, axis=(2, 3), keepdims=True)                     # (N, C, 1, 1)
    y = jnp.einsum("rc,nchw->nrhw", w1, y) + b1[None, :, None, None]
    y = jnp.maximum(y, 0.0)
    y = jnp.einsum("cr,nrhw->nchw", w2, y) + b2[None, :, None, None]
    return x * jax.nn.sigmoid(y)


if __name__ == "__main__":
    key = jax.random.PRNGKey(0)
    N, C, H, W = 2, 32, 16, 16
    reduction = 4                 # SELayer(channel=32, reduction=4) -> hidden = 8
    Cr = C // reduction

    k_x, k_w1, k_b1, k_w2, k_b2 = jax.random.split(key, 5)
    x = jax.random.normal(k_x, (N, C, H, W), dtype=jnp.float32)
    # Deterministic parameter init (synthetic; shapes match nn.Conv2d 1x1 weights).
    w1 = jax.random.normal(k_w1, (Cr, C), dtype=jnp.float32) * (1.0 / C) ** 0.5
    b1 = jax.random.normal(k_b1, (Cr,), dtype=jnp.float32) * 0.1
    w2 = jax.random.normal(k_w2, (C, Cr), dtype=jnp.float32) * (1.0 / Cr) ** 0.5
    b2 = jax.random.normal(k_b2, (C,), dtype=jnp.float32) * 0.1

    out = se_layer(x, w1, b1, w2, b2)
    jax.block_until_ready(out)

    ref = se_layer_ref(x, w1, b1, w2, b2)
    assert out.shape == ref.shape and out.dtype == ref.dtype
    assert jnp.allclose(out, ref, atol=1e-5, rtol=1e-5)

    # Exercise the padded / multi-tile path (HW = 400 is not a multiple of 128).
    x2 = jax.random.normal(key, (N, C, 20, 20), dtype=jnp.float32)
    out2 = se_layer(x2, w1, b1, w2, b2, tile_hw=256)
    jax.block_until_ready(out2)
    ref2 = se_layer_ref(x2, w1, b1, w2, b2)
    assert jnp.allclose(out2, ref2, atol=1e-5, rtol=1e-5)

    print("KERNEL_OK")
</pallas_src>

<mosaic_0001>
module attributes {stable_mosaic.version = 11 : i64} {
  func.func @_pool_kernel(%arg0: i32, %arg1: i32, %arg2: memref<1x32x256xf32, #tpu.memory_space<vmem>>, %arg3: memref<1x32x1xf32, #tpu.memory_space<vmem>>, %arg4: memref<32x1xf32, #tpu.memory_space<vmem>>) attributes {dimension_semantics = [#tpu.dimension_semantics<parallel>, #tpu.dimension_semantics<arbitrary>], iteration_bounds = array<i64: 2, 1>, scalar_prefetch = 0 : i64, scratch_operands = 1 : i64, tpu.core_type = #tpu.core_type<tc>, window_params = [{transform_indices = @transform_0, window_bounds = array<i64: 1, 32, 256>}, {transform_indices = @transform_1, window_bounds = array<i64: 1, 32, 1>}]} {
    %c0_i32 = arith.constant 0 : i32
    %0 = arith.cmpi eq, %arg1, %c0_i32 : i32
    %1 = arith.extui %0 : i1 to i32
    %c0_i32_0 = arith.constant 0 : i32
    %2 = arith.cmpi ne, %1, %c0_i32_0 : i32
    scf.if %2 {
      %cst_9 = arith.constant 0.000000e+00 : f32
      %13 = vector.broadcast %cst_9 : f32 to vector<32x1xf32>
      %c0_10 = arith.constant 0 : index
      %c0_11 = arith.constant 0 : index
      %14 = vector.load %arg4[%c0_10, %c0_11] : memref<32x1xf32, #tpu.memory_space<vmem>>, vector<32x1xf32>
      tpu.vector_store %arg4[%c0_10, %c0_11], %13 {strides = array<i32>} : memref<32x1xf32, #tpu.memory_space<vmem>>, vector<32x1xf32>,
    } else {
    }
    %c0 = arith.constant 0 : index
    %c0_1 = arith.constant 0 : index
    %3 = vector.load %arg4[%c0, %c0_1] : memref<32x1xf32, #tpu.memory_space<vmem>>, vector<32x1xf32>
    %c0_2 = arith.constant 0 : index
    %c0_3 = arith.constant 0 : index
    %c0_4 = arith.constant 0 : index
    %4 = vector.load %arg2[%c0_2, %c0_3, %c0_4] : memref<1x32x256xf32, #tpu.memory_space<vmem>>, vector<1x32x256xf32>
    %5 = vector.shape_cast %4 : vector<1x32x256xf32> to vector<32x256xf32>
    %cst = arith.constant dense<0.000000e+00> : vector<32xf32>
    %6 = vector.multi_reduction <add>, %5, %cst [1] : vector<32x256xf32> to vector<32xf32>
    %7 = vector.shape_cast %6 : vector<32xf32> to vector<32x1xf32>
    %8 = arith.addf %3, %7 : vector<32x1xf32>
    %c0_5 = arith.constant 0 : index
    %c0_6 = arith.constant 0 : index
    %9 = vector.load %arg4[%c0_5, %c0_6] : memref<32x1xf32, #tpu.memory_space<vmem>>, vector<32x1xf32>
    tpu.vector_store %arg4[%c0_5, %c0_6], %8 {strides = array<i32>} : memref<32x1xf32, #tpu.memory_space<vmem>>, vector<32x1xf32>,
    %c0_i32_7 = arith.constant 0 : i32
    %10 = arith.cmpi eq, %arg1, %c0_i32_7 : i32
    %11 = arith.extui %10 : i1 to i32
    %c0_i32_8 = arith.constant 0 : i32
    %12 = arith.cmpi ne, %11, %c0_i32_8 : i32
    scf.if %12 {
      %c0_9 = arith.constant 0 : index
      %c0_10 = arith.constant 0 : index
      %13 = vector.load %arg4[%c0_9, %c0_10] : memref<32x1xf32, #tpu.memory_space<vmem>>, vector<32x1xf32>
      %cst_11 = arith.constant 3.906250e-03 : f32
      %14 = vector.broadcast %cst_11 : f32 to vector<32x1xf32>
      %15 = arith.mulf %13, %14 : vector<32x1xf32>
      %c0_12 = arith.constant 0 : index
      %c0_13 = arith.constant 0 : index
      %c0_14 = arith.constant 0 : index
      %16 = vector.load %arg3[%c0_12, %c0_13, %c0_14] : memref<1x32x1xf32, #tpu.memory_space<vmem>>, vector<1x32x1xf32>
      %17 = vector.shape_cast %16 : vector<1x32x1xf32> to vector<32x1xf32>
      %18 = vector.shape_cast %15 : vector<32x1xf32> to vector<1x32x1xf32>
      tpu.vector_store %arg3[%c0_12, %c0_13, %c0_14], %18 {strides = array<i32>} : memref<1x32x1xf32, #tpu.memory_space<vmem>>, vector<1x32x1xf32>,
    } else {
    }
    return
  }
  func.func @transform_0(%arg0: i32, %arg1: i32) -> (i32, i32, i32) {
    %c0_i32 = arith.constant 0 : i32
    %c0_i32_0 = arith.constant 0 : i32
    return %arg0, %c0_i32, %arg1 : i32, i32, i32
  }
  func.func @transform_1(%arg0: i32, %arg1: i32) -> (i32, i32, i32) {
    %c0_i32 = arith.constant 0 : i32
    %c0_i32_0 = arith.constant 0 : i32
    %c0_i32_1 = arith.constant 0 : i32
    return %arg0, %c0_i32, %c0_i32_0 : i32, i32, i32
  }
}

</mosaic_0001>

<llo_original>
// kernel: tpu_custom_call.1
$region0: #{tpu_custom_call.1}
  #allocation0 [shape = 'u32[]', space=smem, size = 0x4, offset = 0x4, fixed_abs, tag = 'smem constant byte address 0x4 - core index']
  #allocation1 [shape = 'u32[144,128]{1,0:T(1,128)}', space=vmem, size = 0x12000, scoped, tag = 'internal scratch']
  #allocation2 [shape = 'f32[32,1]{1,0:T(8,128)}', space=vmem, size = 0x4000, scoped, tag = 'scratch operand']
  %s0 = inlined_call_operand.hbm [shape: f32[2,32,256], index: 0, kind: input, shape index: {}]
  %s1 = inlined_call_operand.vmem [shape: f32[2,32,1], index: 1, kind: output, shape index: {}]
  %s2 = sld [smem:[#allocation0]]
  $region49: #{tpu_custom_call.1} parent=0
    _
  %s4 = ssub.s32 1, %s2
  %s5 = scalar_select 0, %s4, %s2
  $region1: #{tpu_custom_call.1} parent=0
    #allocation3 [shape = 'u8[65536]{0}', space=vmem, size = 0x10000, scoped, tag = 'input window, operand 0']
    #allocation4 [shape = 's32[2]{0}', space=sflag, size = 0x8, scoped, tag = 'scoped memory for tpu_custom_call.1']
    %6 = vsyncpa [#allocation4], 0
    %s7 = scalar_lea.sflag [#allocation4], 1
    %8 = vsyncpa %s7, 0
    loop: start=0, step=1, limit=4
    $region2: #{tpu_custom_call.1} parent=1 // loop_pre_header
      _
    $region3: #{tpu_custom_call.1} parent=1 // loop_header
      %s10 = sphi 0, %s14
      %p11 = scmp.ge.s32.totalorder %s10, 4
      %s17 = sphi 0, %s29
      %s18 = sphi 0, %s25
      %s19 = sphi 0, %s17
      %s20 = sphi 0, %s18
      %s21 = sphi 0, %s19
      %s22 = sphi 0, %s20
      %s34 = sphi 0, %s36
      %s37 = sphi 0, %s34
      %s38 = sphi 0, %s37
      %s54 = sphi 0, %s38
      %s60 = sphi 0, %s62
      %s63 = sphi 0, %s60
      %s64 = sphi 0, %s63
      %s80 = sphi 0, %s64
    $region4: #{tpu_custom_call.1} parent=1 // loop_header_branch
      %13 = sbr.rel (%p11) target = $region8
    $region5: #{tpu_custom_call.1} parent=1 // loop_body
      %s15 = ssub.s32 %s10, 1
      %s16 = ssub.s32 %s10, 2
      %s23 = sadd.s32 1, %s18
      %p24 = scmp.ge.s32.totalorder %s23, 1
      %s25 = scalar_select %p24, 0, %s23
      %s26 = sadd.s32 1, %s17
      %s27 = scalar_select %p24, %s26, %s17
      %p28 = scmp.ge.s32.totalorder %s27, 2
      %s29 = scalar_select %p28, 0, %s27
      %s30 = ssub.s32 %s17, %s29
      %s31 = ssub.s32 %s18, %s25
      %s32 = sor.u32 %s30, %s31
      %p33 = scmp.eq.s32.totalorder %s32, 0
      %s35 = sadd.s32 %s34, 1
      %s36 = scalar_select %p33, %s34, %s35
      %p39 = pneg %p33
      %p40 = scmp.eq.s32.totalorder %s10, 1
      %p41 = por %p39, %p40
      %p42 = scmp.ne.s32.totalorder %s34, %s37
      %p43 = scmp.eq.s32.totalorder %s10, 0
      %p44 = por %p42, %p43
      %p45 = scmp.ne.s32.totalorder %s34, %s37
      %p46 = scmp.eq.s32.totalorder %s15, 1
      %p47 = por %p45, %p46
      %p48 = scmp.ne.s32.totalorder %s37, %s38
      %p49 = scmp.eq.s32.totalorder %s15, 0
      %p50 = por %p48, %p49
      %p51 = scmp.ne.s32.totalorder %s37, %s38
      %p52 = scmp.eq.s32.totalorder %s16, 1
      %p53 = por %p51, %p52
      %p55 = scmp.ne.s32.totalorder %s38, %s54
      %p56 = scmp.eq.s32.totalorder %s16, 0
      %p57 = por %p55, %p56
      %s58 = ssub.s32 %s17, %s29
      %p59 = scmp.eq.s32.totalorder %s58, 0
      %s61 = sadd.s32 %s60, 1
      %s62 = scalar_select %p59, %s60, %s61
      %p65 = pneg %p59
      %p66 = scmp.eq.s32.totalorder %s10, 1
      %p67 = por %p65, %p66
      %p68 = scmp.ne.s32.totalorder %s60, %s63
      %p69 = scmp.eq.s32.totalorder %s10, 0
      %p70 = por %p68, %p69
      %p71 = scmp.ne.s32.totalorder %s60, %s63
      %p72 = scmp.eq.s32.totalorder %s15, 1
      %p73 = por %p71, %p72
      %p74 = scmp.ne.s32.totalorder %s63, %s64
      %p75 = scmp.eq.s32.totalorder %s15, 0
      %p76 = por %p74, %p75
      %p77 = scmp.ne.s32.totalorder %s63, %s64
      %p78 = scmp.eq.s32.totalorder %s16, 1
      %p79 = por %p77, %p78
      %p81 = scmp.ne.s32.totalorder %s64, %s80
      %p82 = scmp.eq.s32.totalorder %s16, 0
      %p83 = por %p81, %p82
      %p84 = scmp.le.s32.totalorder 1, %s10
      %p85 = scmp.lt.s32.totalorder %s10, 3
      %p86 = pnand %p84, %p85
      %p87 = pneg %p86
      // Predicated region
      $region9: #{tpu_custom_call.1} parent=5 // pred_check
        _
      $region10: #{tpu_custom_call.1} parent=5 // pred_check_branch
        %89 = sbr.rel (%p86) target = $region12
      $region11: #{tpu_custom_call.1} parent=5 // pred_region
        %s90 = ssub.s32 %s10, 1
      $region12: #{tpu_custom_call.1} parent=5 // pred_fallthru
        _
      %p91 = scmp.lt.s32.totalorder %s10, 2
      // Predicated region
      $region13: #{tpu_custom_call.1} parent=5 // pred_check
        %p92 = pneg %p91
      $region14: #{tpu_custom_call.1} parent=5 // pred_check_branch
        %94 = sbr.rel (%p92) target = $region16
      $region15: #{tpu_custom_call.1} parent=5 // pred_region
        // Predicated region
        $region17: #{tpu_custom_call.1} parent=15 // pred_check
          %p95 = pneg %p44
        $region18: #{tpu_custom_call.1} parent=15 // pred_check_branch
          %97 = sbr.rel (%p95) target = $region20
        $region19: #{tpu_custom_call.1} parent=15 // pred_region
          %s98 = sand.u32 %s34, 1
          %s99 = scalar_lea.sflag [#allocation4], %s98
          %s100 = sand.u32 %s34, 1
          %s101 = smul.addr %s100, 64
          %s102 = scalar_lea.vmem [#allocation3], %s101
          %s103 = smul.u32 2, %s18
          %s105 = ssub.s32 1024, 1024
          %106 = vsyncadd %s99, %s105
          %s107 = smul.addr %s17, 8
          %s108 = sadd.s32 %s103, %s107
          %s109 = smul.addr %s108, 128
          %s110 = scalar_lea.hbm %s0, %s109
          %s111 = sshll.u32 %s102, 4
          %s112 = int_to_ptr.vmem [resolvable:$true] %s111
          %117 = dma.hbm_to_vmem [thread:$0]  %s110, 1024, %s112, %s99, 256, 256, 16
        $region20: #{tpu_custom_call.1} parent=15 // pred_fallthru
          _
      $region16: #{tpu_custom_call.1} parent=5 // pred_fallthru
        _
      %p118 = scmp.le.s32.totalorder 1, %s10
      %p119 = scmp.lt.s32.totalorder %s10, 3
      %p120 = pnand %p118, %p119
      %p121 = pneg %p120
      // Predicated region
      $region21: #{tpu_custom_call.1} parent=5 // pred_check
        _
      $region22: #{tpu_custom_call.1} parent=5 // pred_check_branch
        %123 = sbr.rel (%p120) target = $region24
      $region23: #{tpu_custom_call.1} parent=5 // pred_region
        %s124 = ssub.s32 %s10, 1
        %s125 = sand.u32 %s37, 1
        %s126 = scalar_lea.sflag [#allocation4], %s125
        %s127 = sand.u32 %s37, 1
        %s128 = smul.addr %s127, 64
        %s129 = scalar_lea.vmem [#allocation3], %s128
        // Predicated region
        $region25: #{tpu_custom_call.1} parent=23 // pred_check
          %p130 = pneg %p50
        $region26: #{tpu_custom_call.1} parent=23 // pred_check_branch
          %132 = sbr.rel (%p130) target = $region28
        $region27: #{tpu_custom_call.1} parent=23 // pred_region
          %133 = dma.done %s126, 1024
        $region28: #{tpu_custom_call.1} parent=23 // pred_fallthru
          _
        %s134 = sand.u32 %s37, 1
        %s135 = scalar_lea.sflag [#allocation4], %s134
        %s136 = sand.u32 %s37, 1
        %s137 = smul.addr %s136, 64
        %s138 = scalar_lea.vmem [#allocation3], %s137
        %p139 = pneg %p50
        %p140 = pneg %p47
        %p141 = pneg %p76
        %p142 = pneg %p73
        %p143 = scmp.lt.s32.totalorder %s19, 1
        %s144 = scalar_select %p143, %s19, 1
        %s145 = smul.addr %s144, 4
        %s146 = smul.addr %s145, 8
        %s147 = scalar_lea.vmem %s1, %s146
        %s148 = smul.u32 2, %s20
        %p149 = scmp.lt.s32.totalorder %s19, 1
        %s150 = scalar_select %p149, %s19, 1
        %s151 = smul.addr %s150, 4
        %s152 = smul.addr %s151, 8
        %s153 = scalar_lea.vmem %s1, %s152
        %p154 = scmp.eq.s32.totalorder %s20, 0
        // Predicated region
        $region29: #{tpu_custom_call.1} parent=23 // pred_check
          %p155 = pneg %p154
        $region30: #{tpu_custom_call.1} parent=23 // pred_check_branch
          %157 = sbr.rel (%p155) target = $region32
        $region31: #{tpu_custom_call.1} parent=23 // pred_region
          %vm158 = vcmask 7168
          %159 = vst.msk [vmem:[#allocation2] sm:$0xff] %vm158, 0.0
          %160 = vst.msk [vmem:[#allocation2 + $0x8] sm:$0xff] %vm158, 0.0
          %161 = vst.msk [vmem:[#allocation2 + $0x10] sm:$0xff] %vm158, 0.0
          %162 = vst.msk [vmem:[#allocation2 + $0x18] sm:$0xff] %vm158, 0.0
        $region32: #{tpu_custom_call.1} parent=23 // pred_fallthru
          _
        %v163 = vld [vmem:[#allocation2] sm:$0xff]
        %v164 = vld [vmem:[#allocation2 + $0x8] sm:$0xff]
        %v165 = vld [vmem:[#allocation2 + $0x10] sm:$0xff]
        %v166 = vld [vmem:[#allocation2 + $0x18] sm:$0xff]
        %v167 = vld [vmem:[%s129] sm:$0xff]
        %v168 = vld [vmem:[%s129 + $0x8] sm:$0xff]
        %v169 = vld [vmem:[%s129 + $0x10] sm:$0xff]
        %v170 = vld [vmem:[%s129 + $0x18] sm:$0xff]
        %v171 = vld [vmem:[%s129 + $0x20] sm:$0xff]
        %v172 = vld [vmem:[%s129 + $0x28] sm:$0xff]
        %v173 = vld [vmem:[%s129 + $0x30] sm:$0xff]
        %v174 = vld [vmem:[%s129 + $0x38] sm:$0xff]
        %v175 = vadd.f32 %v167, %v168
        %176 = vadd.xlane.f32.xlu0 %v175
        %v177 = vpop.xlane.xlu0 %176
        %v178 = vadd.f32 %v169, %v170
        %179 = vadd.xlane.f32.xlu0 %v178
        %v180 = vpop.xlane.xlu0 %179
        %v181 = vadd.f32 %v171, %v172
        %182 = vadd.xlane.f32.xlu0 %v181
        %v183 = vpop.xlane.xlu0 %182
        %v184 = vadd.f32 %v173, %v174
        %185 = vadd.xlane.f32.xlu0 %v184
        %v186 = vpop.xlane.xlu0 %185
        %v187 = vadd.f32 %v163, %v177
        %v188 = vadd.f32 %v164, %v180
        %v189 = vadd.f32 %v165, %v183
        %v190 = vadd.f32 %v166, %v186
        %vm191 = vcmask 7168
        %192 = vst.msk [vmem:[#allocation2] sm:$0xff] %vm191, %v187
        %193 = vst.msk [vmem:[#allocation2 + $0x8] sm:$0xff] %vm191, %v188
        %194 = vst.msk [vmem:[#allocation2 + $0x10] sm:$0xff] %vm191, %v189
        %195 = vst.msk [vmem:[#allocation2 + $0x18] sm:$0xff] %vm191, %v190
        // Predicated region
        $region33: #{tpu_custom_call.1} parent=23 // pred_check
          %p196 = pneg %p154
        $region34: #{tpu_custom_call.1} parent=23 // pred_check_branch
          %198 = sbr.rel (%p196) target = $region36
        $region35: #{tpu_custom_call.1} parent=23 // pred_region
          %v199 = vld [vmem:[#allocation2] sm:$0xff]
          %v200 = vld [vmem:[#allocation2 + $0x8] sm:$0xff]
          %v201 = vld [vmem:[#allocation2 + $0x10] sm:$0xff]
          %v202 = vld [vmem:[#allocation2 + $0x18] sm:$0xff]
          %v203 = vmul.f32 %v199, 0.00390625
          %v204 = vmul.f32 %v200, 0.00390625
          %v205 = vmul.f32 %v201, 0.00390625
          %v206 = vmul.f32 %v202, 0.00390625
          %207 = vst.msk [vmem:[%s153] sm:$0xff] %vm191, %v203
          %208 = vst.msk [vmem:[%s153 + $0x8] sm:$0xff] %vm191, %v204
          %209 = vst.msk [vmem:[%s153 + $0x10] sm:$0xff] %vm191, %v205
          %210 = vst.msk [vmem:[%s153 + $0x18] sm:$0xff] %vm191, %v206
        $region36: #{tpu_custom_call.1} parent=23 // pred_fallthru
          _
        %p211 = scmp.lt.s32.totalorder %s19, 1
        %s212 = scalar_select %p211, %s19, 1
        %s213 = smul.addr %s212, 4
        %s214 = smul.addr %s213, 8
        %s215 = scalar_lea.vmem %s1, %s214
        // Predicated region
        $region37: #{tpu_custom_call.1} parent=23 // pred_check
          %p216 = pneg %p73
        $region38: #{tpu_custom_call.1} parent=23 // pred_check_branch
          %218 = sbr.rel (%p216) target = $region40
        $region39: #{tpu_custom_call.1} parent=23 // pred_region
          _
        $region40: #{tpu_custom_call.1} parent=23 // pred_fallthru
          _
      $region24: #{tpu_custom_call.1} parent=5 // pred_fallthru
        _
      %p219 = scmp.le.s32.totalorder 2, %s10
      // Predicated region
      $region41: #{tpu_custom_call.1} parent=5 // pred_check
        %p220 = pneg %p219
      $region42: #{tpu_custom_call.1} parent=5 // pred_check_branch
        %222 = sbr.rel (%p220) target = $region44
      $region43: #{tpu_custom_call.1} parent=5 // pred_region
        %s223 = ssub.s32 %s10, 2
        // Predicated region
        $region45: #{tpu_custom_call.1} parent=43 // pred_check
          %p224 = pneg %p79
        $region46: #{tpu_custom_call.1} parent=43 // pred_check_branch
          %226 = sbr.rel (%p224) target = $region48
        $region47: #{tpu_custom_call.1} parent=43 // pred_region
          %p227 = scmp.lt.s32.totalorder %s21, 1
          %s228 = scalar_select %p227, %s21, 1
          %s229 = smul.addr %s228, 4
          %s230 = smul.addr %s229, 8
          %s231 = scalar_lea.vmem %s1, %s230
        $region48: #{tpu_custom_call.1} parent=43 // pred_fallthru
          _
      $region44: #{tpu_custom_call.1} parent=5 // pred_fallthru
        _
    $region6: #{tpu_custom_call.1} parent=1 // loop_footer
      %s14 = sadd.s32 1, %s10
    $region7: #{tpu_custom_call.1} parent=1 // loop_footer_branch
      %9 = sbr.rel target = $region3
    $region8: #{tpu_custom_call.1} parent=1 // loop_exit
      _
    %232 = vsyncpa [#allocation4], 1
    %s233 = scalar_lea.sflag [#allocation4], 1
    %234 = vsyncpa %s233, 1

</llo_original>
